<compile_context>
chip_gen: v6e
topology: v6e:2x2x1
jax: 0.10.0
libtpu: 0.0.40
codegen_flags: <defaults>
</compile_context>

<pallas_src>
import jax
import jax.numpy as jnp
from jax.experimental import pallas as pl
from jax.experimental.pallas import tpu as pltpu

_LANE = 128
_SUBLANE = 8


def attention_gate_kernel(g_ref, x_ref, wg_ref, wx_ref, b_ref, wpsi_ref,
                          bpsi_ref, out_ref):
    """One (bn, C, R, 128) tile of the attention gate.

    g_ref : (bn, F_g, R, 128) VMEM   spatial rows on sublanes, lanes dense
    x_ref : (bn, F_l, R, 128) VMEM
    wg_ref: (F_g*F_int,) SMEM        wg_ref[c*F_int + k]
    wx_ref: (F_l*F_int,) SMEM        wx_ref[c*F_int + k]
    b_ref : (F_int,) SMEM            fused bg + bx
    wpsi_ref: (F_int,) SMEM
    bpsi_ref: (1,) SMEM
    """
    _, F_g, _, _ = g_ref.shape
    F_l = x_ref.shape[1]
    F_int = b_ref.shape[0]

    gv = g_ref[...].astype(jnp.float32)          # (bn, F_g, R, 128)
    xv = x_ref[...].astype(jnp.float32)          # (bn, F_l, R, 128)

    # psi logits, one F_int channel at a time.  Each term is a scalar(SMEM)
    # broadcast multiply on a fully dense (bn, R, 128) tile -> pure VPU work,
    # no MXU for these tiny channel counts; sigmoid goes to the EUP slot.
    logits = None
    for k in range(F_int):
        acc = None
        for c in range(F_g):
            t = wg_ref[c * F_int + k] * gv[:, c]
            acc = t if acc is None else acc + t
        for c in range(F_l):
            acc = acc + wx_ref[c * F_int + k] * xv[:, c]
        acc = acc + b_ref[k]                                 # fused bias, once
        t = wpsi_ref[k] * jnp.maximum(acc, 0.0)              # ReLU + psi weight
        logits = t if logits is None else logits + t
    logits = logits + bpsi_ref[0]

    psi = jax.nn.sigmoid(logits)                             # (bn, R, 128)
    out_ref[...] = (xv * psi[:, None, :, :]).astype(out_ref.dtype)


def _select_tiles(N, rows, row_bytes, *,
                  max_step_bytes=4 << 20,       # ~4 MiB HBM traffic per step
                  min_grid_steps=8,             # keep both v7x TCs busy
                  fold_batch_below=256 << 10):
    """Pick (bn, row_tile).  row_bytes = bytes/row (g + x + out, one batch)."""
    # Row-tile candidates: multiples of 8 that divide `rows`, plus `rows`
    # itself (full extent is always a legal block dim).
    cands = sorted({r for r in range(_SUBLANE, rows + 1, _SUBLANE)
                    if rows % r == 0} | {rows})
    feasible = [r for r in cands if r * row_bytes <= max_step_bytes]
    if not feasible:
        rt = cands[0]                                        # smallest
    else:
        good = [r for r in feasible if N * (rows // r) >= min_grid_steps]
        rt = max(good) if good else max(feasible)

    # For tiny problems, fold several batch elements into one grid step so the
    # ~0.35us/step overhead is amortized.
    bn = 1
    if rt == rows and rows * row_bytes < fold_batch_below and N > 1:
        for cand_bn in range(N, 0, -1):
            if N % cand_bn == 0 and cand_bn * rows * row_bytes <= max_step_bytes:
                bn = cand_bn
                break
    return bn, rt


def attention_gate(g, x, params, *, vmem_limit_bytes=32 * 1024 * 1024):
    """g: (N, F_g, H, W), x: (N, F_l, H, W)  ->  (N, F_l, H, W)"""
    wg, bg, wx, bx, wpsi, bpsi = params
    N, F_g, H, W = g.shape
    _, F_l, _, _ = x.shape
    F_int = wg.shape[1]
    S = H * W

    # This VPU-broadcast formulation targets small channel counts; for large
    # channel counts a lane-dense MXU matmul formulation would be preferred.
    assert F_int * (F_g + F_l) <= 1024, "use an MXU matmul path for large channels"

    # NCHW -> (N, C, S); pad S to a multiple of 128 so every load/store is
    # lane-dense (unmasked vst); then view as (N, C, rows, 128).
    S_pad = -(-S // _LANE) * _LANE
    g3 = g.reshape(N, F_g, S)
    x3 = x.reshape(N, F_l, S)
    if S_pad != S:
        pad = ((0, 0), (0, 0), (0, S_pad - S))
        g3 = jnp.pad(g3, pad)
        x3 = jnp.pad(x3, pad)
    rows = S_pad // _LANE
    g4 = g3.reshape(N, F_g, rows, _LANE)
    x4 = x3.reshape(N, F_l, rows, _LANE)

    # Per-row HBM traffic (g in + x in + out), one batch element.
    row_bytes = (F_g * jnp.dtype(g.dtype).itemsize
                 + 2 * F_l * jnp.dtype(x.dtype).itemsize) * _LANE
    bn, rt = _select_tiles(N, rows, row_bytes)
    grid = (N // bn, rows // rt)

    # Host-side parameter packing: fuse the two conv biases, flatten the tiny
    # weight matrices to 1-D so SMEM isn't padded to (8,128)-word tiles.
    b_fused = (bg + bx).reshape(F_int).astype(jnp.float32)
    wg1 = wg.reshape(F_g * F_int).astype(jnp.float32)
    wx1 = wx.reshape(F_l * F_int).astype(jnp.float32)
    wpsi1 = wpsi.reshape(F_int).astype(jnp.float32)
    bpsi1 = bpsi.reshape(1).astype(jnp.float32)

    out4 = pl.pallas_call(
        attention_gate_kernel,
        out_shape=jax.ShapeDtypeStruct((N, F_l, rows, _LANE), x.dtype),
        grid=grid,
        in_specs=[
            pl.BlockSpec((bn, F_g, rt, _LANE), lambda n, s: (n, 0, s, 0)),  # g
            pl.BlockSpec((bn, F_l, rt, _LANE), lambda n, s: (n, 0, s, 0)),  # x
            pl.BlockSpec(memory_space=pltpu.MemorySpace.SMEM),   # W_g (flat)
            pl.BlockSpec(memory_space=pltpu.MemorySpace.SMEM),   # W_x (flat)
            pl.BlockSpec(memory_space=pltpu.MemorySpace.SMEM),   # bg + bx
            pl.BlockSpec(memory_space=pltpu.MemorySpace.SMEM),   # W_psi
            pl.BlockSpec(memory_space=pltpu.MemorySpace.SMEM),   # b_psi
        ],
        out_specs=pl.BlockSpec((bn, F_l, rt, _LANE), lambda n, s: (n, 0, s, 0)),
        compiler_params=pltpu.CompilerParams(
            dimension_semantics=("parallel", "parallel"),
            vmem_limit_bytes=vmem_limit_bytes),
    )(g4, x4, wg1, wx1, b_fused, wpsi1, bpsi1)

    out3 = out4.reshape(N, F_l, S_pad)
    if S_pad != S:
        out3 = out3[:, :, :S]
    return out3.reshape(N, F_l, H, W)


def init_params(key, F_g, F_l, F_int):
    """Deterministic synthetic weights matching the PyTorch module's shapes.
    PyTorch conv weight (F_int, F_g, 1, 1) is stored here as (F_g, F_int)
    so weight[in_channel, out_channel]."""
    k1, k2, k3, k4, k5, k6 = jax.random.split(key, 6)
    wg = jax.random.normal(k1, (F_g, F_int), jnp.float32) * 0.1
    bg = jax.random.normal(k2, (F_int,), jnp.float32) * 0.1
    wx = jax.random.normal(k3, (F_l, F_int), jnp.float32) * 0.1
    bx = jax.random.normal(k4, (F_int,), jnp.float32) * 0.1
    wpsi = jax.random.normal(k5, (F_int,), jnp.float32) * 0.1
    bpsi = jax.random.normal(k6, (1,), jnp.float32) * 0.1
    return wg, bg, wx, bx, wpsi, bpsi


def _reference(g, x, params):
    wg, bg, wx, bx, wpsi, bpsi = params
    F_int = wg.shape[1]
    g1 = jnp.einsum('nchw,ck->nkhw', g, wg) + bg.reshape(1, F_int, 1, 1)
    x1 = jnp.einsum('nchw,ck->nkhw', x, wx) + bx.reshape(1, F_int, 1, 1)
    p = jnp.maximum(g1 + x1, 0.0)
    psi = jax.nn.sigmoid(
        jnp.einsum('nkhw,k->nhw', p, wpsi) + bpsi[0])[:, None, :, :]
    return x * psi


if __name__ == "__main__":
    key = jax.random.PRNGKey(0)
    kg, kx, kp = jax.random.split(key, 3)

    N, F_g, F_l, H, W = 2, 4, 4, 16, 16
    F_int = (F_g + F_l) // 2

    g = jax.random.normal(kg, (N, F_g, H, W), jnp.float32)
    x = jax.random.normal(kx, (N, F_l, H, W), jnp.float32)
    params = init_params(kp, F_g, F_l, F_int)

    out = attention_gate(g, x, params)
    jax.block_until_ready(out)

    ref = _reference(g, x, params)
    assert jnp.allclose(out, ref, atol=1e-5, rtol=1e-5), \
        float(jnp.max(jnp.abs(out - ref)))

    # Also exercise the lane-padding path (S not a multiple of 128).
    H2, W2 = 13, 7
    g2 = jax.random.normal(kg, (N, F_g, H2, W2), jnp.float32)
    x2 = jax.random.normal(kx, (N, F_l, H2, W2), jnp.float32)
    out2 = attention_gate(g2, x2, params)
    jax.block_until_ready(out2)
    ref2 = _reference(g2, x2, params)
    assert jnp.allclose(out2, ref2, atol=1e-5, rtol=1e-5), \
        float(jnp.max(jnp.abs(out2 - ref2)))

    print("KERNEL_OK")
</pallas_src>

<mosaic_0001>
module attributes {stable_mosaic.version = 11 : i64} {
  func.func @attention_gate_kernel(%arg0: i32, %arg1: i32, %arg2: memref<2x4x2x128xf32, #tpu.memory_space<vmem>>, %arg3: memref<2x4x2x128xf32, #tpu.memory_space<vmem>>, %arg4: memref<16xf32, #tpu.memory_space<smem>>, %arg5: memref<16xf32, #tpu.memory_space<smem>>, %arg6: memref<4xf32, #tpu.memory_space<smem>>, %arg7: memref<4xf32, #tpu.memory_space<smem>>, %arg8: memref<1xf32, #tpu.memory_space<smem>>, %arg9: memref<2x4x2x128xf32, #tpu.memory_space<vmem>>) attributes {dimension_semantics = [#tpu.dimension_semantics<parallel>, #tpu.dimension_semantics<parallel>], iteration_bounds = array<i64: 1, 1>, scalar_prefetch = 0 : i64, scratch_operands = 0 : i64, tpu.core_type = #tpu.core_type<tc>, window_params = [{transform_indices = @transform_0, window_bounds = array<i64: 2, 4, 2, 128>}, {transform_indices = @transform_1, window_bounds = array<i64: 2, 4, 2, 128>}, {transform_indices = @transform_2, window_bounds = array<i64: 16>}, {transform_indices = @transform_3, window_bounds = array<i64: 16>}, {transform_indices = @transform_4, window_bounds = array<i64: 4>}, {transform_indices = @transform_5, window_bounds = array<i64: 4>}, {transform_indices = @transform_6, window_bounds = array<i64: 1>}, {transform_indices = @transform_7, window_bounds = array<i64: 2, 4, 2, 128>}]} {
    %c0 = arith.constant 0 : index
    %c0_0 = arith.constant 0 : index
    %c0_1 = arith.constant 0 : index
    %c0_2 = arith.constant 0 : index
    %0 = vector.load %arg2[%c0, %c0_0, %c0_1, %c0_2] : memref<2x4x2x128xf32, #tpu.memory_space<vmem>>, vector<2x4x2x128xf32>
    %c0_3 = arith.constant 0 : index
    %c0_4 = arith.constant 0 : index
    %c0_5 = arith.constant 0 : index
    %c0_6 = arith.constant 0 : index
    %1 = vector.load %arg3[%c0_3, %c0_4, %c0_5, %c0_6] : memref<2x4x2x128xf32, #tpu.memory_space<vmem>>, vector<2x4x2x128xf32>
    %c0_7 = arith.constant 0 : index
    %2 = memref.load %arg4[%c0_7] : memref<16xf32, #tpu.memory_space<smem>>
    %3 = vector.extract_strided_slice %0 {offsets = [0, 0, 0, 0], sizes = [2, 1, 2, 128], strides = [1, 1, 1, 1]} : vector<2x4x2x128xf32> to vector<2x1x2x128xf32>
    %4 = vector.shape_cast %3 : vector<2x1x2x128xf32> to vector<2x2x128xf32>
    %5 = vector.broadcast %2 : f32 to vector<2x2x128xf32>
    %6 = arith.mulf %5, %4 : vector<2x2x128xf32>
    %c4 = arith.constant 4 : index
    %7 = memref.load %arg4[%c4] : memref<16xf32, #tpu.memory_space<smem>>
    %8 = vector.extract_strided_slice %0 {offsets = [0, 1, 0, 0], sizes = [2, 1, 2, 128], strides = [1, 1, 1, 1]} : vector<2x4x2x128xf32> to vector<2x1x2x128xf32>
    %9 = vector.shape_cast %8 : vector<2x1x2x128xf32> to vector<2x2x128xf32>
    %10 = vector.broadcast %7 : f32 to vector<2x2x128xf32>
    %11 = arith.mulf %10, %9 : vector<2x2x128xf32>
    %12 = arith.addf %6, %11 : vector<2x2x128xf32>
    %c8 = arith.constant 8 : index
    %13 = memref.load %arg4[%c8] : memref<16xf32, #tpu.memory_space<smem>>
    %14 = vector.extract_strided_slice %0 {offsets = [0, 2, 0, 0], sizes = [2, 1, 2, 128], strides = [1, 1, 1, 1]} : vector<2x4x2x128xf32> to vector<2x1x2x128xf32>
    %15 = vector.shape_cast %14 : vector<2x1x2x128xf32> to vector<2x2x128xf32>
    %16 = vector.broadcast %13 : f32 to vector<2x2x128xf32>
    %17 = arith.mulf %16, %15 : vector<2x2x128xf32>
    %18 = arith.addf %12, %17 : vector<2x2x128xf32>
    %c12 = arith.constant 12 : index
    %19 = memref.load %arg4[%c12] : memref<16xf32, #tpu.memory_space<smem>>
    %20 = vector.extract_strided_slice %0 {offsets = [0, 3, 0, 0], sizes = [2, 1, 2, 128], strides = [1, 1, 1, 1]} : vector<2x4x2x128xf32> to vector<2x1x2x128xf32>
    %21 = vector.shape_cast %20 : vector<2x1x2x128xf32> to vector<2x2x128xf32>
    %22 = vector.broadcast %19 : f32 to vector<2x2x128xf32>
    %23 = arith.mulf %22, %21 : vector<2x2x128xf32>
    %24 = arith.addf %18, %23 : vector<2x2x128xf32>
    %c0_8 = arith.constant 0 : index
    %25 = memref.load %arg5[%c0_8] : memref<16xf32, #tpu.memory_space<smem>>
    %26 = vector.extract_strided_slice %1 {offsets = [0, 0, 0, 0], sizes = [2, 1, 2, 128], strides = [1, 1, 1, 1]} : vector<2x4x2x128xf32> to vector<2x1x2x128xf32>
    %27 = vector.shape_cast %26 : vector<2x1x2x128xf32> to vector<2x2x128xf32>
    %28 = vector.broadcast %25 : f32 to vector<2x2x128xf32>
    %29 = arith.mulf %28, %27 : vector<2x2x128xf32>
    %30 = arith.addf %24, %29 : vector<2x2x128xf32>
    %c4_9 = arith.constant 4 : index
    %31 = memref.load %arg5[%c4_9] : memref<16xf32, #tpu.memory_space<smem>>
    %32 = vector.extract_strided_slice %1 {offsets = [0, 1, 0, 0], sizes = [2, 1, 2, 128], strides = [1, 1, 1, 1]} : vector<2x4x2x128xf32> to vector<2x1x2x128xf32>
    %33 = vector.shape_cast %32 : vector<2x1x2x128xf32> to vector<2x2x128xf32>
    %34 = vector.broadcast %31 : f32 to vector<2x2x128xf32>
    %35 = arith.mulf %34, %33 : vector<2x2x128xf32>
    %36 = arith.addf %30, %35 : vector<2x2x128xf32>
    %c8_10 = arith.constant 8 : index
    %37 = memref.load %arg5[%c8_10] : memref<16xf32, #tpu.memory_space<smem>>
    %38 = vector.extract_strided_slice %1 {offsets = [0, 2, 0, 0], sizes = [2, 1, 2, 128], strides = [1, 1, 1, 1]} : vector<2x4x2x128xf32> to vector<2x1x2x128xf32>
    %39 = vector.shape_cast %38 : vector<2x1x2x128xf32> to vector<2x2x128xf32>
    %40 = vector.broadcast %37 : f32 to vector<2x2x128xf32>
    %41 = arith.mulf %40, %39 : vector<2x2x128xf32>
    %42 = arith.addf %36, %41 : vector<2x2x128xf32>
    %c12_11 = arith.constant 12 : index
    %43 = memref.load %arg5[%c12_11] : memref<16xf32, #tpu.memory_space<smem>>
    %44 = vector.extract_strided_slice %1 {offsets = [0, 3, 0, 0], sizes = [2, 1, 2, 128], strides = [1, 1, 1, 1]} : vector<2x4x2x128xf32> to vector<2x1x2x128xf32>
    %45 = vector.shape_cast %44 : vector<2x1x2x128xf32> to vector<2x2x128xf32>
    %46 = vector.broadcast %43 : f32 to vector<2x2x128xf32>
    %47 = arith.mulf %46, %45 : vector<2x2x128xf32>
    %48 = arith.addf %42, %47 : vector<2x2x128xf32>
    %c0_12 = arith.constant 0 : index
    %49 = memref.load %arg6[%c0_12] : memref<4xf32, #tpu.memory_space<smem>>
    %50 = vector.broadcast %49 : f32 to vector<2x2x128xf32>
    %51 = arith.addf %48, %50 : vector<2x2x128xf32>
    %c0_13 = arith.constant 0 : index
    %52 = memref.load %arg7[%c0_13] : memref<4xf32, #tpu.memory_space<smem>>
    %cst = arith.constant 0.000000e+00 : f32
    %53 = vector.broadcast %cst : f32 to vector<2x2x128xf32>
    %54 = arith.maximumf %51, %53 : vector<2x2x128xf32>
    %55 = vector.broadcast %52 : f32 to vector<2x2x128xf32>
    %56 = arith.mulf %55, %54 : vector<2x2x128xf32>
    %c1 = arith.constant 1 : index
    %57 = memref.load %arg4[%c1] : memref<16xf32, #tpu.memory_space<smem>>
    %58 = vector.extract_strided_slice %0 {offsets = [0, 0, 0, 0], sizes = [2, 1, 2, 128], strides = [1, 1, 1, 1]} : vector<2x4x2x128xf32> to vector<2x1x2x128xf32>
    %59 = vector.shape_cast %58 : vector<2x1x2x128xf32> to vector<2x2x128xf32>
    %60 = vector.broadcast %57 : f32 to vector<2x2x128xf32>
    %61 = arith.mulf %60, %59 : vector<2x2x128xf32>
    %c5 = arith.constant 5 : index
    %62 = memref.load %arg4[%c5] : memref<16xf32, #tpu.memory_space<smem>>
    %63 = vector.extract_strided_slice %0 {offsets = [0, 1, 0, 0], sizes = [2, 1, 2, 128], strides = [1, 1, 1, 1]} : vector<2x4x2x128xf32> to vector<2x1x2x128xf32>
    %64 = vector.shape_cast %63 : vector<2x1x2x128xf32> to vector<2x2x128xf32>
    %65 = vector.broadcast %62 : f32 to vector<2x2x128xf32>
    %66 = arith.mulf %65, %64 : vector<2x2x128xf32>
    %67 = arith.addf %61, %66 : vector<2x2x128xf32>
    %c9 = arith.constant 9 : index
    %68 = memref.load %arg4[%c9] : memref<16xf32, #tpu.memory_space<smem>>
    %69 = vector.extract_strided_slice %0 {offsets = [0, 2, 0, 0], sizes = [2, 1, 2, 128], strides = [1, 1, 1, 1]} : vector<2x4x2x128xf32> to vector<2x1x2x128xf32>
    %70 = vector.shape_cast %69 : vector<2x1x2x128xf32> to vector<2x2x128xf32>
    %71 = vector.broadcast %68 : f32 to vector<2x2x128xf32>
    %72 = arith.mulf %71, %70 : vector<2x2x128xf32>
    %73 = arith.addf %67, %72 : vector<2x2x128xf32>
    %c13 = arith.constant 13 : index
    %74 = memref.load %arg4[%c13] : memref<16xf32, #tpu.memory_space<smem>>
    %75 = vector.extract_strided_slice %0 {offsets = [0, 3, 0, 0], sizes = [2, 1, 2, 128], strides = [1, 1, 1, 1]} : vector<2x4x2x128xf32> to vector<2x1x2x128xf32>
    %76 = vector.shape_cast %75 : vector<2x1x2x128xf32> to vector<2x2x128xf32>
    %77 = vector.broadcast %74 : f32 to vector<2x2x128xf32>
    %78 = arith.mulf %77, %76 : vector<2x2x128xf32>
    %79 = arith.addf %73, %78 : vector<2x2x128xf32>
    %c1_14 = arith.constant 1 : index
    %80 = memref.load %arg5[%c1_14] : memref<16xf32, #tpu.memory_space<smem>>
    %81 = vector.extract_strided_slice %1 {offsets = [0, 0, 0, 0], sizes = [2, 1, 2, 128], strides = [1, 1, 1, 1]} : vector<2x4x2x128xf32> to vector<2x1x2x128xf32>
    %82 = vector.shape_cast %81 : vector<2x1x2x128xf32> to vector<2x2x128xf32>
    %83 = vector.broadcast %80 : f32 to vector<2x2x128xf32>
    %84 = arith.mulf %83, %82 : vector<2x2x128xf32>
    %85 = arith.addf %79, %84 : vector<2x2x128xf32>
    %c5_15 = arith.constant 5 : index
    %86 = memref.load %arg5[%c5_15] : memref<16xf32, #tpu.memory_space<smem>>
    %87 = vector.extract_strided_slice %1 {offsets = [0, 1, 0, 0], sizes = [2, 1, 2, 128], strides = [1, 1, 1, 1]} : vector<2x4x2x128xf32> to vector<2x1x2x128xf32>
    %88 = vector.shape_cast %87 : vector<2x1x2x128xf32> to vector<2x2x128xf32>
    %89 = vector.broadcast %86 : f32 to vector<2x2x128xf32>
    %90 = arith.mulf %89, %88 : vector<2x2x128xf32>
    %91 = arith.addf %85, %90 : vector<2x2x128xf32>
    %c9_16 = arith.constant 9 : index
    %92 = memref.load %arg5[%c9_16] : memref<16xf32, #tpu.memory_space<smem>>
    %93 = vector.extract_strided_slice %1 {offsets = [0, 2, 0, 0], sizes = [2, 1, 2, 128], strides = [1, 1, 1, 1]} : vector<2x4x2x128xf32> to vector<2x1x2x128xf32>
    %94 = vector.shape_cast %93 : vector<2x1x2x128xf32> to vector<2x2x128xf32>
    %95 = vector.broadcast %92 : f32 to vector<2x2x128xf32>
    %96 = arith.mulf %95, %94 : vector<2x2x128xf32>
    %97 = arith.addf %91, %96 : vector<2x2x128xf32>
    %c13_17 = arith.constant 13 : index
    %98 = memref.load %arg5[%c13_17] : memref<16xf32, #tpu.memory_space<smem>>
    %99 = vector.extract_strided_slice %1 {offsets = [0, 3, 0, 0], sizes = [2, 1, 2, 128], strides = [1, 1, 1, 1]} : vector<2x4x2x128xf32> to vector<2x1x2x128xf32>
    %100 = vector.shape_cast %99 : vector<2x1x2x128xf32> to vector<2x2x128xf32>
    %101 = vector.broadcast %98 : f32 to vector<2x2x128xf32>
    %102 = arith.mulf %101, %100 : vector<2x2x128xf32>
    %103 = arith.addf %97, %102 : vector<2x2x128xf32>
    %c1_18 = arith.constant 1 : index
    %104 = memref.load %arg6[%c1_18] : memref<4xf32, #tpu.memory_space<smem>>
    %105 = vector.broadcast %104 : f32 to vector<2x2x128xf32>
    %106 = arith.addf %103, %105 : vector<2x2x128xf32>
    %c1_19 = arith.constant 1 : index
    %107 = memref.load %arg7[%c1_19] : memref<4xf32, #tpu.memory_space<smem>>
    %cst_20 = arith.constant 0.000000e+00 : f32
    %108 = vector.broadcast %cst_20 : f32 to vector<2x2x128xf32>
    %109 = arith.maximumf %106, %108 : vector<2x2x128xf32>
    %110 = vector.broadcast %107 : f32 to vector<2x2x128xf32>
    %111 = arith.mulf %110, %109 : vector<2x2x128xf32>
    %112 = arith.addf %56, %111 : vector<2x2x128xf32>
    %c2 = arith.constant 2 : index
    %113 = memref.load %arg4[%c2] : memref<16xf32, #tpu.memory_space<smem>>
    %114 = vector.extract_strided_slice %0 {offsets = [0, 0, 0, 0], sizes = [2, 1, 2, 128], strides = [1, 1, 1, 1]} : vector<2x4x2x128xf32> to vector<2x1x2x128xf32>
    %115 = vector.shape_cast %114 : vector<2x1x2x128xf32> to vector<2x2x128xf32>
    %116 = vector.broadcast %113 : f32 to vector<2x2x128xf32>
    %117 = arith.mulf %116, %115 : vector<2x2x128xf32>
    %c6 = arith.constant 6 : index
    %118 = memref.load %arg4[%c6] : memref<16xf32, #tpu.memory_space<smem>>
    %119 = vector.extract_strided_slice %0 {offsets = [0, 1, 0, 0], sizes = [2, 1, 2, 128], strides = [1, 1, 1, 1]} : vector<2x4x2x128xf32> to vector<2x1x2x128xf32>
    %120 = vector.shape_cast %119 : vector<2x1x2x128xf32> to vector<2x2x128xf32>
    %121 = vector.broadcast %118 : f32 to vector<2x2x128xf32>
    %122 = arith.mulf %121, %120 : vector<2x2x128xf32>
    %123 = arith.addf %117, %122 : vector<2x2x128xf32>
    %c10 = arith.constant 10 : index
    %124 = memref.load %arg4[%c10] : memref<16xf32, #tpu.memory_space<smem>>
    %125 = vector.extract_strided_slice %0 {offsets = [0, 2, 0, 0], sizes = [2, 1, 2, 128], strides = [1, 1, 1, 1]} : vector<2x4x2x128xf32> to vector<2x1x2x128xf32>
    %126 = vector.shape_cast %125 : vector<2x1x2x128xf32> to vector<2x2x128xf32>
    %127 = vector.broadcast %124 : f32 to vector<2x2x128xf32>
    %128 = arith.mulf %127, %126 : vector<2x2x128xf32>
    %129 = arith.addf %123, %128 : vector<2x2x128xf32>
    %c14 = arith.constant 14 : index
    %130 = memref.load %arg4[%c14] : memref<16xf32, #tpu.memory_space<smem>>
    %131 = vector.extract_strided_slice %0 {offsets = [0, 3, 0, 0], sizes = [2, 1, 2, 128], strides = [1, 1, 1, 1]} : vector<2x4x2x128xf32> to vector<2x1x2x128xf32>
    %132 = vector.shape_cast %131 : vector<2x1x2x128xf32> to vector<2x2x128xf32>
    %133 = vector.broadcast %130 : f32 to vector<2x2x128xf32>
    %134 = arith.mulf %133, %132 : vector<2x2x128xf32>
    %135 = arith.addf %129, %134 : vector<2x2x128xf32>
    %c2_21 = arith.constant 2 : index
    %136 = memref.load %arg5[%c2_21] : memref<16xf32, #tpu.memory_space<smem>>
    %137 = vector.extract_strided_slice %1 {offsets = [0, 0, 0, 0], sizes = [2, 1, 2, 128], strides = [1, 1, 1, 1]} : vector<2x4x2x128xf32> to vector<2x1x2x128xf32>
    %138 = vector.shape_cast %137 : vector<2x1x2x128xf32> to vector<2x2x128xf32>
    %139 = vector.broadcast %136 : f32 to vector<2x2x128xf32>
    %140 = arith.mulf %139, %138 : vector<2x2x128xf32>
    %141 = arith.addf %135, %140 : vector<2x2x128xf32>
    %c6_22 = arith.constant 6 : index
    %142 = memref.load %arg5[%c6_22] : memref<16xf32, #tpu.memory_space<smem>>
    %143 = vector.extract_strided_slice %1 {offsets = [0, 1, 0, 0], sizes = [2, 1, 2, 128], strides = [1, 1, 1, 1]} : vector<2x4x2x128xf32> to vector<2x1x2x128xf32>
    %144 = vector.shape_cast %143 : vector<2x1x2x128xf32> to vector<2x2x128xf32>
    %145 = vector.broadcast %142 : f32 to vector<2x2x128xf32>
    %146 = arith.mulf %145, %144 : vector<2x2x128xf32>
    %147 = arith.addf %141, %146 : vector<2x2x128xf32>
    %c10_23 = arith.constant 10 : index
    %148 = memref.load %arg5[%c10_23] : memref<16xf32, #tpu.memory_space<smem>>
    %149 = vector.extract_strided_slice %1 {offsets = [0, 2, 0, 0], sizes = [2, 1, 2, 128], strides = [1, 1, 1, 1]} : vector<2x4x2x128xf32> to vector<2x1x2x128xf32>
    %150 = vector.shape_cast %149 : vector<2x1x2x128xf32> to vector<2x2x128xf32>
    %151 = vector.broadcast %148 : f32 to vector<2x2x128xf32>
    %152 = arith.mulf %151, %150 : vector<2x2x128xf32>
    %153 = arith.addf %147, %152 : vector<2x2x128xf32>
    %c14_24 = arith.constant 14 : index
    %154 = memref.load %arg5[%c14_24] : memref<16xf32, #tpu.memory_space<smem>>
    %155 = vector.extract_strided_slice %1 {offsets = [0, 3, 0, 0], sizes = [2, 1, 2, 128], strides = [1, 1, 1, 1]} : vector<2x4x2x128xf32> to vector<2x1x2x128xf32>
    %156 = vector.shape_cast %155 : vector<2x1x2x128xf32> to vector<2x2x128xf32>
    %157 = vector.broadcast %154 : f32 to vector<2x2x128xf32>
    %158 = arith.mulf %157, %156 : vector<2x2x128xf32>
    %159 = arith.addf %153, %158 : vector<2x2x128xf32>
    %c2_25 = arith.constant 2 : index
    %160 = memref.load %arg6[%c2_25] : memref<4xf32, #tpu.memory_space<smem>>
    %161 = vector.broadcast %160 : f32 to vector<2x2x128xf32>
    %162 = arith.addf %159, %161 : vector<2x2x128xf32>
    %c2_26 = arith.constant 2 : index
    %163 = memref.load %arg7[%c2_26] : memref<4xf32, #tpu.memory_space<smem>>
    %cst_27 = arith.constant 0.000000e+00 : f32
    %164 = vector.broadcast %cst_27 : f32 to vector<2x2x128xf32>
    %165 = arith.maximumf %162, %164 : vector<2x2x128xf32>
    %166 = vector.broadcast %163 : f32 to vector<2x2x128xf32>
    %167 = arith.mulf %166, %165 : vector<2x2x128xf32>
    %168 = arith.addf %112, %167 : vector<2x2x128xf32>
    %c3 = arith.constant 3 : index
    %169 = memref.load %arg4[%c3] : memref<16xf32, #tpu.memory_space<smem>>
    %170 = vector.extract_strided_slice %0 {offsets = [0, 0, 0, 0], sizes = [2, 1, 2, 128], strides = [1, 1, 1, 1]} : vector<2x4x2x128xf32> to vector<2x1x2x128xf32>
    %171 = vector.shape_cast %170 : vector<2x1x2x128xf32> to vector<2x2x128xf32>
    %172 = vector.broadcast %169 : f32 to vector<2x2x128xf32>
    %173 = arith.mulf %172, %171 : vector<2x2x128xf32>
    %c7 = arith.constant 7 : index
    %174 = memref.load %arg4[%c7] : memref<16xf32, #tpu.memory_space<smem>>
    %175 = vector.extract_strided_slice %0 {offsets = [0, 1, 0, 0], sizes = [2, 1, 2, 128], strides = [1, 1, 1, 1]} : vector<2x4x2x128xf32> to vector<2x1x2x128xf32>
    %176 = vector.shape_cast %175 : vector<2x1x2x128xf32> to vector<2x2x128xf32>
    %177 = vector.broadcast %174 : f32 to vector<2x2x128xf32>
    %178 = arith.mulf %177, %176 : vector<2x2x128xf32>
    %179 = arith.addf %173, %178 : vector<2x2x128xf32>
    %c11 = arith.constant 11 : index
    %180 = memref.load %arg4[%c11] : memref<16xf32, #tpu.memory_space<smem>>
    %181 = vector.extract_strided_slice %0 {offsets = [0, 2, 0, 0], sizes = [2, 1, 2, 128], strides = [1, 1, 1, 1]} : vector<2x4x2x128xf32> to vector<2x1x2x128xf32>
    %182 = vector.shape_cast %181 : vector<2x1x2x128xf32> to vector<2x2x128xf32>
    %183 = vector.broadcast %180 : f32 to vector<2x2x128xf32>
    %184 = arith.mulf %183, %182 : vector<2x2x128xf32>
    %185 = arith.addf %179, %184 : vector<2x2x128xf32>
    %c15 = arith.constant 15 : index
    %186 = memref.load %arg4[%c15] : memref<16xf32, #tpu.memory_space<smem>>
    %187 = vector.extract_strided_slice %0 {offsets = [0, 3, 0, 0], sizes = [2, 1, 2, 128], strides = [1, 1, 1, 1]} : vector<2x4x2x128xf32> to vector<2x1x2x128xf32>
    %188 = vector.shape_cast %187 : vector<2x1x2x128xf32> to vector<2x2x128xf32>
    %189 = vector.broadcast %186 : f32 to vector<2x2x128xf32>
    %190 = arith.mulf %189, %188 : vector<2x2x128xf32>
    %191 = arith.addf %185, %190 : vector<2x2x128xf32>
    %c3_28 = arith.constant 3 : index
    %192 = memref.load %arg5[%c3_28] : memref<16xf32, #tpu.memory_space<smem>>
    %193 = vector.extract_strided_slice %1 {offsets = [0, 0, 0, 0], sizes = [2, 1, 2, 128], strides = [1, 1, 1, 1]} : vector<2x4x2x128xf32> to vector<2x1x2x128xf32>
    %194 = vector.shape_cast %193 : vector<2x1x2x128xf32> to vector<2x2x128xf32>
    %195 = vector.broadcast %192 : f32 to vector<2x2x128xf32>
    %196 = arith.mulf %195, %194 : vector<2x2x128xf32>
    %197 = arith.addf %191, %196 : vector<2x2x128xf32>
    %c7_29 = arith.constant 7 : index
    %198 = memref.load %arg5[%c7_29] : memref<16xf32, #tpu.memory_space<smem>>
    %199 = vector.extract_strided_slice %1 {offsets = [0, 1, 0, 0], sizes = [2, 1, 2, 128], strides = [1, 1, 1, 1]} : vector<2x4x2x128xf32> to vector<2x1x2x128xf32>
    %200 = vector.shape_cast %199 : vector<2x1x2x128xf32> to vector<2x2x128xf32>
    %201 = vector.broadcast %198 : f32 to vector<2x2x128xf32>
    %202 = arith.mulf %201, %200 : vector<2x2x128xf32>
    %203 = arith.addf %197, %202 : vector<2x2x128xf32>
    %c11_30 = arith.constant 11 : index
    %204 = memref.load %arg5[%c11_30] : memref<16xf32, #tpu.memory_space<smem>>
    %205 = vector.extract_strided_slice %1 {offsets = [0, 2, 0, 0], sizes = [2, 1, 2, 128], strides = [1, 1, 1, 1]} : vector<2x4x2x128xf32> to vector<2x1x2x128xf32>
    %206 = vector.shape_cast %205 : vector<2x1x2x128xf32> to vector<2x2x128xf32>
    %207 = vector.broadcast %204 : f32 to vector<2x2x128xf32>
    %208 = arith.mulf %207, %206 : vector<2x2x128xf32>
    %209 = arith.addf %203, %208 : vector<2x2x128xf32>
    %c15_31 = arith.constant 15 : index
    %210 = memref.load %arg5[%c15_31] : memref<16xf32, #tpu.memory_space<smem>>
    %211 = vector.extract_strided_slice %1 {offsets = [0, 3, 0, 0], sizes = [2, 1, 2, 128], strides = [1, 1, 1, 1]} : vector<2x4x2x128xf32> to vector<2x1x2x128xf32>
    %212 = vector.shape_cast %211 : vector<2x1x2x128xf32> to vector<2x2x128xf32>
    %213 = vector.broadcast %210 : f32 to vector<2x2x128xf32>
    %214 = arith.mulf %213, %212 : vector<2x2x128xf32>
    %215 = arith.addf %209, %214 : vector<2x2x128xf32>
    %c3_32 = arith.constant 3 : index
    %216 = memref.load %arg6[%c3_32] : memref<4xf32, #tpu.memory_space<smem>>
    %217 = vector.broadcast %216 : f32 to vector<2x2x128xf32>
    %218 = arith.addf %215, %217 : vector<2x2x128xf32>
    %c3_33 = arith.constant 3 : index
    %219 = memref.load %arg7[%c3_33] : memref<4xf32, #tpu.memory_space<smem>>
    %cst_34 = arith.constant 0.000000e+00 : f32
    %220 = vector.broadcast %cst_34 : f32 to vector<2x2x128xf32>
    %221 = arith.maximumf %218, %220 : vector<2x2x128xf32>
    %222 = vector.broadcast %219 : f32 to vector<2x2x128xf32>
    %223 = arith.mulf %222, %221 : vector<2x2x128xf32>
    %224 = arith.addf %168, %223 : vector<2x2x128xf32>
    %c0_35 = arith.constant 0 : index
    %225 = memref.load %arg8[%c0_35] : memref<1xf32, #tpu.memory_space<smem>>
    %226 = vector.broadcast %225 : f32 to vector<2x2x128xf32>
    %227 = arith.addf %224, %226 : vector<2x2x128xf32>
    %228 = arith.negf %227 : vector<2x2x128xf32>
    %229 = math.exp %228 : vector<2x2x128xf32>
    %cst_36 = arith.constant 1.000000e+00 : f32
    %230 = vector.broadcast %cst_36 : f32 to vector<2x2x128xf32>
    %231 = arith.addf %230, %229 : vector<2x2x128xf32>
    %232 = arith.divf %230, %231 : vector<2x2x128xf32>
    %233 = vector.shape_cast %232 : vector<2x2x128xf32> to vector<2x1x2x128xf32>
    %234 = vector.broadcast %233 : vector<2x1x2x128xf32> to vector<2x4x2x128xf32>
    %235 = arith.mulf %1, %234 : vector<2x4x2x128xf32>
    %c0_37 = arith.constant 0 : index
    %c0_38 = arith.constant 0 : index
    %c0_39 = arith.constant 0 : index
    %c0_40 = arith.constant 0 : index
    %236 = vector.load %arg9[%c0_37, %c0_38, %c0_39, %c0_40] : memref<2x4x2x128xf32, #tpu.memory_space<vmem>>, vector<2x4x2x128xf32>
    tpu.vector_store %arg9[%c0_37, %c0_38, %c0_39, %c0_40], %235 {strides = array<i32>} : memref<2x4x2x128xf32, #tpu.memory_space<vmem>>, vector<2x4x2x128xf32>,
    return
  }
  func.func @transform_0(%arg0: i32, %arg1: i32) -> (i32, i32, i32, i32) {
    %c0_i32 = arith.constant 0 : i32
    %c0_i32_0 = arith.constant 0 : i32
    %c0_i32_1 = arith.constant 0 : i32
    return %arg0, %c0_i32, %arg1, %c0_i32_0 : i32, i32, i32, i32
  }
  func.func @transform_1(%arg0: i32, %arg1: i32) -> (i32, i32, i32, i32) {
    %c0_i32 = arith.constant 0 : i32
    %c0_i32_0 = arith.constant 0 : i32
    %c0_i32_1 = arith.constant 0 : i32
    return %arg0, %c0_i32, %arg1, %c0_i32_0 : i32, i32, i32, i32
  }
  func.func @transform_2(%arg0: i32, %arg1: i32) -> i32 {
    %c0_i32 = arith.constant 0 : i32
    %c0_i32_0 = arith.constant 0 : i32
    return %c0_i32 : i32
  }
  func.func @transform_3(%arg0: i32, %arg1: i32) -> i32 {
    %c0_i32 = arith.constant 0 : i32
    %c0_i32_0 = arith.constant 0 : i32
    return %c0_i32 : i32
  }
  func.func @transform_4(%arg0: i32, %arg1: i32) -> i32 {
    %c0_i32 = arith.constant 0 : i32
    %c0_i32_0 = arith.constant 0 : i32
    return %c0_i32 : i32
  }
  func.func @transform_5(%arg0: i32, %arg1: i32) -> i32 {
    %c0_i32 = arith.constant 0 : i32
    %c0_i32_0 = arith.constant 0 : i32
    return %c0_i32 : i32
  }
  func.func @transform_6(%arg0: i32, %arg1: i32) -> i32 {
    %c0_i32 = arith.constant 0 : i32
    %c0_i32_0 = arith.constant 0 : i32
    return %c0_i32 : i32
  }
  func.func @transform_7(%arg0: i32, %arg1: i32) -> (i32, i32, i32, i32) {
    %c0_i32 = arith.constant 0 : i32
    %c0_i32_0 = arith.constant 0 : i32
    %c0_i32_1 = arith.constant 0 : i32
    return %arg0, %c0_i32, %arg1, %c0_i32_0 : i32, i32, i32, i32
  }
}

</mosaic_0001>

<llo_original>
// kernel: tpu_custom_call.1
$region0: #{tpu_custom_call.1}
  #allocation0 [shape = 'u32[]', space=smem, size = 0x4, offset = 0x4, fixed_abs, tag = 'smem constant byte address 0x4 - core index']
  #allocation1 [shape = 'u32[144,128]{1,0:T(1,128)}', space=vmem, size = 0x12000, scoped, tag = 'internal scratch']
  #allocation2 [shape = 'f32[1]{0:T(128)S(6)}', space=smem, size = 0x200, scoped, tag = 'scoped memory for tpu_custom_call.1']
  %s0 = inlined_call_operand.hbm [shape: f32[2,4,2,128], index: 0, kind: input, shape index: {}]
  %s1 = inlined_call_operand.hbm [shape: f32[2,4,2,128], index: 1, kind: input, shape index: {}]
  %s2 = inlined_call_operand.vmem [shape: f32[16], index: 2, kind: input, shape index: {}]
  %s3 = inlined_call_operand.vmem [shape: f32[16], index: 3, kind: input, shape index: {}]
  %s4 = inlined_call_operand.vmem [shape: f32[4], index: 4, kind: input, shape index: {}]
  %s5 = inlined_call_operand.vmem [shape: f32[4], index: 5, kind: input, shape index: {}]
  %s6 = inlined_call_operand.<no memory space> [shape: f32[1], index: 6, kind: input, shape index: {}]
  %s7 = inlined_call_operand.hbm [shape: f32[2,4,2,128], index: 7, kind: output, shape index: {}]
  %s8 = sld [smem:[#allocation0]]
  $region62: #{tpu_custom_call.1} parent=0
    _
  %s10 = ssub.s32 1, %s8
  %s11 = scalar_select 0, %s10, %s8
  %12 = sst [smem:[#allocation2]] %s6
  $region1: #{tpu_custom_call.1} parent=0
    #allocation3 [shape = 'u8[8192]{0}', space=vmem, size = 0x2000, scoped, tag = 'input window, operand 0, single buffered']
    #allocation4 [shape = 's32[1]{0}', space=sflag, size = 0x4, scoped, tag = 'scoped memory for tpu_custom_call.1']
    #allocation5 [shape = 's32[1]{0}', space=sflag, size = 0x4, scoped, tag = 'scoped memory for tpu_custom_call.1']
    #allocation6 [shape = 's32[1]{0}', space=sflag, size = 0x4, scoped, tag = 'scoped memory for tpu_custom_call.1']
    #allocation7 [shape = 'u8[8192]{0}', space=vmem, size = 0x2000, scoped, tag = 'input window, operand 1, single buffered']
    #allocation8 [shape = 's32[1]{0}', space=sflag, size = 0x4, scoped, tag = 'scoped memory for tpu_custom_call.1']
    #allocation9 [shape = 'u8[512]{0}', space=smem, size = 0x200, scoped, tag = 'input window, operand 2, single buffered']
    #allocation10 [shape = 'u8[512]{0}', space=smem, size = 0x200, scoped, tag = 'input window, operand 3, single buffered']
    #allocation11 [shape = 's32[1]{0}', space=sflag, size = 0x4, scoped, tag = 'scoped memory for tpu_custom_call.1']
    #allocation12 [shape = 'u8[512]{0}', space=smem, size = 0x200, scoped, tag = 'input window, operand 4, single buffered']
    #allocation13 [shape = 'u8[512]{0}', space=smem, size = 0x200, scoped, tag = 'input window, operand 5, single buffered']
    #allocation14 [shape = 's32[1]{0}', space=sflag, size = 0x4, scoped, tag = 'scoped memory for tpu_custom_call.1']
    #allocation15 [shape = 'u8[8192]{0}', space=vmem, size = 0x2000, scoped, tag = 'output window, operand 0, single buffered']
    %13 = vsyncpa [#allocation4], 0
    %14 = vsyncpa [#allocation8], 0
    %15 = vsyncpa [#allocation6], 0
    %16 = vsyncpa [#allocation11], 0
    %17 = vsyncpa [#allocation14], 0
    %18 = vsyncpa [#allocation5], 0
    // Predicated region
    $region2: #{tpu_custom_call.1} parent=1 // pred_check
      _
    $region3: #{tpu_custom_call.1} parent=1 // pred_check_branch
      %20 = sbr.rel (0) target = $region5
    $region4: #{tpu_custom_call.1} parent=1 // pred_region
      %s22 = ssub.s32 256, 256
      %23 = vsyncadd [#allocation4], %s22
      %s24 = sshll.u32 [#allocation3], 4
      %s25 = int_to_ptr.vmem [resolvable:$true] %s24
      %30 = dma.hbm_to_vmem [thread:$0]  %s0, 256, %s25, [#allocation4], 32, 32, 2
    $region5: #{tpu_custom_call.1} parent=1 // pred_fallthru
      _
    // Predicated region
    $region6: #{tpu_custom_call.1} parent=1 // pred_check
      _
    $region7: #{tpu_custom_call.1} parent=1 // pred_check_branch
      %32 = sbr.rel (0) target = $region9
    $region8: #{tpu_custom_call.1} parent=1 // pred_region
      %s34 = ssub.s32 256, 256
      %35 = vsyncadd [#allocation8], %s34
      %s36 = sshll.u32 [#allocation7], 4
      %s37 = int_to_ptr.vmem [resolvable:$true] %s36
      %42 = dma.hbm_to_vmem [thread:$0]  %s1, 256, %s37, [#allocation8], 32, 32, 2
    $region9: #{tpu_custom_call.1} parent=1 // pred_fallthru
      _
    // Predicated region
    $region10: #{tpu_custom_call.1} parent=1 // pred_check
      _
    $region11: #{tpu_custom_call.1} parent=1 // pred_check_branch
      %44 = sbr.rel (0) target = $region13
    $region12: #{tpu_custom_call.1} parent=1 // pred_region
      %s46 = ssub.s32 16, 16
      %47 = vsyncadd [#allocation6], %s46
      %s49 = sshll.u32 %s2, 4
      %s50 = int_to_ptr.vmem [resolvable:$true] %s49
      %52 = dma.vmem_to_smem %s50, 16, [#allocation9], [#allocation6]
    $region13: #{tpu_custom_call.1} parent=1 // pred_fallthru
      _
    // Predicated region
    $region14: #{tpu_custom_call.1} parent=1 // pred_check
      _
    $region15: #{tpu_custom_call.1} parent=1 // pred_check_branch
      %54 = sbr.rel (0) target = $region17
    $region16: #{tpu_custom_call.1} parent=1 // pred_region
      %s56 = ssub.s32 16, 16
      %57 = vsyncadd [#allocation11], %s56
      %s59 = sshll.u32 %s3, 4
      %s60 = int_to_ptr.vmem [resolvable:$true] %s59
      %62 = dma.vmem_to_smem %s60, 16, [#allocation10], [#allocation11]
    $region17: #{tpu_custom_call.1} parent=1 // pred_fallthru
      _
    // Predicated region
    $region18: #{tpu_custom_call.1} parent=1 // pred_check
      _
    $region19: #{tpu_custom_call.1} parent=1 // pred_check_branch
      %64 = sbr.rel (0) target = $region21
    $region20: #{tpu_custom_call.1} parent=1 // pred_region
      %s66 = ssub.s32 16, 16
      %67 = vsyncadd [#allocation11], %s66
      %s69 = sshll.u32 %s4, 4
      %s70 = int_to_ptr.vmem [resolvable:$true] %s69
      %72 = dma.vmem_to_smem %s70, 16, [#allocation12], [#allocation11]
    $region21: #{tpu_custom_call.1} parent=1 // pred_fallthru
      _
    // Predicated region
    $region22: #{tpu_custom_call.1} parent=1 // pred_check
      _
    $region23: #{tpu_custom_call.1} parent=1 // pred_check_branch
      %74 = sbr.rel (0) target = $region25
    $region24: #{tpu_custom_call.1} parent=1 // pred_region
      %s76 = ssub.s32 16, 16
      %77 = vsyncadd [#allocation14], %s76
      %s79 = sshll.u32 %s5, 4
      %s80 = int_to_ptr.vmem [resolvable:$true] %s79
      %82 = dma.vmem_to_smem %s80, 16, [#allocation13], [#allocation14]
    $region25: #{tpu_custom_call.1} parent=1 // pred_fallthru
      _
    // Predicated region
    $region26: #{tpu_custom_call.1} parent=1 // pred_check
      _
    $region27: #{tpu_custom_call.1} parent=1 // pred_check_branch
      %84 = sbr.rel (0) target = $region29
    $region28: #{tpu_custom_call.1} parent=1 // pred_region
      _
    $region29: #{tpu_custom_call.1} parent=1 // pred_fallthru
      _
    // Predicated region
    $region30: #{tpu_custom_call.1} parent=1 // pred_check
      _
    $region31: #{tpu_custom_call.1} parent=1 // pred_check_branch
      %86 = sbr.rel (0) target = $region33
    $region32: #{tpu_custom_call.1} parent=1 // pred_region
      %87 = dma.done [#allocation4], 256
    $region33: #{tpu_custom_call.1} parent=1 // pred_fallthru
      _
    // Predicated region
    $region34: #{tpu_custom_call.1} parent=1 // pred_check
      _
    $region35: #{tpu_custom_call.1} parent=1 // pred_check_branch
      %89 = sbr.rel (0) target = $region37
    $region36: #{tpu_custom_call.1} parent=1 // pred_region
      %90 = dma.done [#allocation8], 256
    $region37: #{tpu_custom_call.1} parent=1 // pred_fallthru
      _
    // Predicated region
    $region38: #{tpu_custom_call.1} parent=1 // pred_check
      _
    $region39: #{tpu_custom_call.1} parent=1 // pred_check_branch
      %92 = sbr.rel (0) target = $region41
    $region40: #{tpu_custom_call.1} parent=1 // pred_region
      %93 = dma.done [#allocation6], 16
    $region41: #{tpu_custom_call.1} parent=1 // pred_fallthru
      _
    // Predicated region
    $region42: #{tpu_custom_call.1} parent=1 // pred_check
      _
    $region43: #{tpu_custom_call.1} parent=1 // pred_check_branch
      %95 = sbr.rel (0) target = $region45
    $region44: #{tpu_custom_call.1} parent=1 // pred_region
      %96 = dma.done [#allocation11], 16
    $region45: #{tpu_custom_call.1} parent=1 // pred_fallthru
      _
    // Predicated region
    $region46: #{tpu_custom_call.1} parent=1 // pred_check
      _
    $region47: #{tpu_custom_call.1} parent=1 // pred_check_branch
      %98 = sbr.rel (0) target = $region49
    $region48: #{tpu_custom_call.1} parent=1 // pred_region
      %99 = dma.done [#allocation11], 16
    $region49: #{tpu_custom_call.1} parent=1 // pred_fallthru
      _
    // Predicated region
    $region50: #{tpu_custom_call.1} parent=1 // pred_check
      _
    $region51: #{tpu_custom_call.1} parent=1 // pred_check_branch
      %101 = sbr.rel (0) target = $region53
    $region52: #{tpu_custom_call.1} parent=1 // pred_region
      %102 = dma.done [#allocation14], 16
    $region53: #{tpu_custom_call.1} parent=1 // pred_fallthru
      _
    %103 = sfence
    %v104 = vld [vmem:[#allocation3] sm:$0x3]
    %v105 = vld [vmem:[#allocation3 + $0x2] sm:$0x3]
    %v106 = vld [vmem:[#allocation3 + $0x4] sm:$0x3]
    %v107 = vld [vmem:[#allocation3 + $0x6] sm:$0x3]
    %v108 = vld [vmem:[#allocation3 + $0x8] sm:$0x3]
    %v109 = vld [vmem:[#allocation3 + $0xa] sm:$0x3]
    %v110 = vld [vmem:[#allocation3 + $0xc] sm:$0x3]
    %v111 = vld [vmem:[#allocation3 + $0xe] sm:$0x3]
    %v112 = vld [vmem:[#allocation7] sm:$0x3]
    %v113 = vld [vmem:[#allocation7 + $0x2] sm:$0x3]
    %v114 = vld [vmem:[#allocation7 + $0x4] sm:$0x3]
    %v115 = vld [vmem:[#allocation7 + $0x6] sm:$0x3]
    %v116 = vld [vmem:[#allocation7 + $0x8] sm:$0x3]
    %v117 = vld [vmem:[#allocation7 + $0xa] sm:$0x3]
    %v118 = vld [vmem:[#allocation7 + $0xc] sm:$0x3]
    %v119 = vld [vmem:[#allocation7 + $0xe] sm:$0x3]
    %s120 = sld [smem:[#allocation9]]
    %v121 = vstv %s120
    %v122 = vmul.f32 %v121, %v104
    %v123 = vmul.f32 %v121, %v108
    %s124 = sld [smem:[#allocation9 + $0x4]]
    %v125 = vstv %s124
    %v126 = vmul.f32 %v125, %v105
    %v127 = vmul.f32 %v125, %v109
    %v128 = vadd.f32 %v122, %v126
    %v129 = vadd.f32 %v123, %v127
    %s130 = sld [smem:[#allocation9 + $0x8]]
    %v131 = vstv %s130
    %v132 = vmul.f32 %v131, %v106
    %v133 = vmul.f32 %v131, %v110
    %v134 = vadd.f32 %v128, %v132
    %v135 = vadd.f32 %v129, %v133
    %s136 = sld [smem:[#allocation9 + $0xc]]
    %v137 = vstv %s136
    %v138 = vmul.f32 %v137, %v107
    %v139 = vmul.f32 %v137, %v111
    %v140 = vadd.f32 %v134, %v138
    %v141 = vadd.f32 %v135, %v139
    %s142 = sld [smem:[#allocation10]]
    %v143 = vstv %s142
    %v144 = vmul.f32 %v143, %v112
    %v145 = vmul.f32 %v143, %v116
    %v146 = vadd.f32 %v140, %v144
    %v147 = vadd.f32 %v141, %v145
    %s148 = sld [smem:[#allocation10 + $0x4]]
    %v149 = vstv %s148
    %v150 = vmul.f32 %v149, %v113
    %v151 = vmul.f32 %v149, %v117
    %v152 = vadd.f32 %v146, %v150
    %v153 = vadd.f32 %v147, %v151
    %s154 = sld [smem:[#allocation10 + $0x8]]
    %v155 = vstv %s154
    %v156 = vmul.f32 %v155, %v114
    %v157 = vmul.f32 %v155, %v118
    %v158 = vadd.f32 %v152, %v156
    %v159 = vadd.f32 %v153, %v157
    %s160 = sld [smem:[#allocation10 + $0xc]]
    %v161 = vstv %s160
    %v162 = vmul.f32 %v161, %v115
    %v163 = vmul.f32 %v161, %v119
    %v164 = vadd.f32 %v158, %v162
    %v165 = vadd.f32 %v159, %v163
    %s166 = sld [smem:[#allocation12]]
    %v167 = vstv %s166
    %v168 = vadd.f32 %v164, %v167
    %v169 = vadd.f32 %v165, %v167
    %s170 = sld [smem:[#allocation13]]
    %v171 = vmax.f32 %v168, 0.0
    %v172 = vmax.f32 %v169, 0.0
    %v173 = vstv %s170
    %v174 = vmul.f32 %v173, %v171
    %v175 = vmul.f32 %v173, %v172
    %s176 = sld [smem:[#allocation9 + $0x1]]
    %v177 = vstv %s176
    %v178 = vmul.f32 %v177, %v104
    %v179 = vmul.f32 %v177, %v108
    %s180 = sld [smem:[#allocation9 + $0x5]]
    %v181 = vstv %s180
    %v182 = vmul.f32 %v181, %v105
    %v183 = vmul.f32 %v181, %v109
    %v184 = vadd.f32 %v178, %v182
    %v185 = vadd.f32 %v179, %v183
    %s186 = sld [smem:[#allocation9 + $0x9]]
    %v187 = vstv %s186
    %v188 = vmul.f32 %v187, %v106
    %v189 = vmul.f32 %v187, %v110
    %v190 = vadd.f32 %v184, %v188
    %v191 = vadd.f32 %v185, %v189
    %s192 = sld [smem:[#allocation9 + $0xd]]
    %v193 = vstv %s192
    %v194 = vmul.f32 %v193, %v107
    %v195 = vmul.f32 %v193, %v111
    %v196 = vadd.f32 %v190, %v194
    %v197 = vadd.f32 %v191, %v195
    %s198 = sld [smem:[#allocation10 + $0x1]]
    %v199 = vstv %s198
    %v200 = vmul.f32 %v199, %v112
    %v201 = vmul.f32 %v199, %v116
    %v202 = vadd.f32 %v196, %v200
    %v203 = vadd.f32 %v197, %v201
    %s204 = sld [smem:[#allocation10 + $0x5]]
    %v205 = vstv %s204
    %v206 = vmul.f32 %v205, %v113
    %v207 = vmul.f32 %v205, %v117
    %v208 = vadd.f32 %v202, %v206
    %v209 = vadd.f32 %v203, %v207
    %s210 = sld [smem:[#allocation10 + $0x9]]
    %v211 = vstv %s210
    %v212 = vmul.f32 %v211, %v114
    %v213 = vmul.f32 %v211, %v118
    %v214 = vadd.f32 %v208, %v212
    %v215 = vadd.f32 %v209, %v213
    %s216 = sld [smem:[#allocation10 + $0xd]]
    %v217 = vstv %s216
    %v218 = vmul.f32 %v217, %v115
    %v219 = vmul.f32 %v217, %v119
    %v220 = vadd.f32 %v214, %v218
    %v221 = vadd.f32 %v215, %v219
    %s222 = sld [smem:[#allocation12 + $0x1]]
    %v223 = vstv %s222
    %v224 = vadd.f32 %v220, %v223
    %v225 = vadd.f32 %v221, %v223
    %s226 = sld [smem:[#allocation13 + $0x1]]
    %v227 = vmax.f32 %v224, 0.0
    %v228 = vmax.f32 %v225, 0.0
    %v229 = vstv %s226
    %v230 = vmul.f32 %v229, %v227
    %v231 = vmul.f32 %v229, %v228
    %v232 = vadd.f32 %v174, %v230
    %v233 = vadd.f32 %v175, %v231
    %s234 = sld [smem:[#allocation9 + $0x2]]
    %v235 = vstv %s234
    %v236 = vmul.f32 %v235, %v104
    %v237 = vmul.f32 %v235, %v108
    %s238 = sld [smem:[#allocation9 + $0x6]]
    %v239 = vstv %s238
    %v240 = vmul.f32 %v239, %v105
    %v241 = vmul.f32 %v239, %v109
    %v242 = vadd.f32 %v236, %v240
    %v243 = vadd.f32 %v237, %v241
    %s244 = sld [smem:[#allocation9 + $0xa]]
    %v245 = vstv %s244
    %v246 = vmul.f32 %v245, %v106
    %v247 = vmul.f32 %v245, %v110
    %v248 = vadd.f32 %v242, %v246
    %v249 = vadd.f32 %v243, %v247
    %s250 = sld [smem:[#allocation9 + $0xe]]
    %v251 = vstv %s250
    %v252 = vmul.f32 %v251, %v107
    %v253 = vmul.f32 %v251, %v111
    %v254 = vadd.f32 %v248, %v252
    %v255 = vadd.f32 %v249, %v253
    %s256 = sld [smem:[#allocation10 + $0x2]]
    %v257 = vstv %s256
    %v258 = vmul.f32 %v257, %v112
    %v259 = vmul.f32 %v257, %v116
    %v260 = vadd.f32 %v254, %v258
    %v261 = vadd.f32 %v255, %v259
    %s262 = sld [smem:[#allocation10 + $0x6]]
    %v263 = vstv %s262
    %v264 = vmul.f32 %v263, %v113
    %v265 = vmul.f32 %v263, %v117
    %v266 = vadd.f32 %v260, %v264
    %v267 = vadd.f32 %v261, %v265
    %s268 = sld [smem:[#allocation10 + $0xa]]
    %v269 = vstv %s268
    %v270 = vmul.f32 %v269, %v114
    %v271 = vmul.f32 %v269, %v118
    %v272 = vadd.f32 %v266, %v270
    %v273 = vadd.f32 %v267, %v271
    %s274 = sld [smem:[#allocation10 + $0xe]]
    %v275 = vstv %s274
    %v276 = vmul.f32 %v275, %v115
    %v277 = vmul.f32 %v275, %v119
    %v278 = vadd.f32 %v272, %v276
    %v279 = vadd.f32 %v273, %v277
    %s280 = sld [smem:[#allocation12 + $0x2]]
    %v281 = vstv %s280
    %v282 = vadd.f32 %v278, %v281
    %v283 = vadd.f32 %v279, %v281
    %s284 = sld [smem:[#allocation13 + $0x2]]
    %v285 = vmax.f32 %v282, 0.0
    %v286 = vmax.f32 %v283, 0.0
    %v287 = vstv %s284
    %v288 = vmul.f32 %v287, %v285
    %v289 = vmul.f32 %v287, %v286
    %v290 = vadd.f32 %v232, %v288
    %v291 = vadd.f32 %v233, %v289
    %s292 = sld [smem:[#allocation9 + $0x3]]
    %v293 = vstv %s292
    %v294 = vmul.f32 %v293, %v104
    %v295 = vmul.f32 %v293, %v108
    %s296 = sld [smem:[#allocation9 + $0x7]]
    %v297 = vstv %s296
    %v298 = vmul.f32 %v297, %v105
    %v299 = vmul.f32 %v297, %v109
    %v300 = vadd.f32 %v294, %v298
    %v301 = vadd.f32 %v295, %v299
    %s302 = sld [smem:[#allocation9 + $0xb]]
    %v303 = vstv %s302
    %v304 = vmul.f32 %v303, %v106
    %v305 = vmul.f32 %v303, %v110
    %v306 = vadd.f32 %v300, %v304
    %v307 = vadd.f32 %v301, %v305
    %s308 = sld [smem:[#allocation9 + $0xf]]
    %v309 = vstv %s308
    %v310 = vmul.f32 %v309, %v107
    %v311 = vmul.f32 %v309, %v111
    %v312 = vadd.f32 %v306, %v310
    %v313 = vadd.f32 %v307, %v311
    %s314 = sld [smem:[#allocation10 + $0x3]]
    %v315 = vstv %s314
    %v316 = vmul.f32 %v315, %v112
    %v317 = vmul.f32 %v315, %v116
    %v318 = vadd.f32 %v312, %v316
    %v319 = vadd.f32 %v313, %v317
    %s320 = sld [smem:[#allocation10 + $0x7]]
    %v321 = vstv %s320
    %v322 = vmul.f32 %v321, %v113
    %v323 = vmul.f32 %v321, %v117
    %v324 = vadd.f32 %v318, %v322
    %v325 = vadd.f32 %v319, %v323
    %s326 = sld [smem:[#allocation10 + $0xb]]
    %v327 = vstv %s326
    %v328 = vmul.f32 %v327, %v114
    %v329 = vmul.f32 %v327, %v118
    %v330 = vadd.f32 %v324, %v328
    %v331 = vadd.f32 %v325, %v329
    %s332 = sld [smem:[#allocation10 + $0xf]]
    %v333 = vstv %s332
    %v334 = vmul.f32 %v333, %v115
    %v335 = vmul.f32 %v333, %v119
    %v336 = vadd.f32 %v330, %v334
    %v337 = vadd.f32 %v331, %v335
    %s338 = sld [smem:[#allocation12 + $0x3]]
    %v339 = vstv %s338
    %v340 = vadd.f32 %v336, %v339
    %v341 = vadd.f32 %v337, %v339
    %s342 = sld [smem:[#allocation13 + $0x3]]
    %v343 = vmax.f32 %v340, 0.0
    %v344 = vmax.f32 %v341, 0.0
    %v345 = vstv %s342
    %v346 = vmul.f32 %v345, %v343
    %v347 = vmul.f32 %v345, %v344
    %v348 = vadd.f32 %v290, %v346
    %v349 = vadd.f32 %v291, %v347
    %s350 = sld [smem:[#allocation2]]
    %v351 = vstv %s350
    %v352 = vadd.f32 %v348, %v351
    %v353 = vadd.f32 %v349, %v351
    %v354 = vxor.u32 %v352, 2147483648
    %v355 = vxor.u32 %v353, 2147483648
    %v356 = vmul.f32 %v354, 1.442695
    %v357 = vpow.pop %v356
    %v358 = vmul.f32 %v355, 1.442695
    %v359 = vpow.pop %v358
    %v360 = vadd.f32 %v357, 1.0
    %v361 = vadd.f32 %v359, 1.0
    %v362 = vrcp.pop %v360
    %v363 = vmul.f32 1.0, %v362
    %v364 = vrcp.pop %v361
    %v365 = vmul.f32 1.0, %v364
    %v366 = vmul.f32 %v112, %v363
    %v367 = vmul.f32 %v113, %v363
    %v368 = vmul.f32 %v114, %v363
    %v369 = vmul.f32 %v115, %v363
    %v370 = vmul.f32 %v116, %v365
    %v371 = vmul.f32 %v117, %v365
    %v372 = vmul.f32 %v118, %v365
    %v373 = vmul.f32 %v119, %v365
    %374 = vst [vmem:[#allocation15] sm:$0x3] %v366
    %375 = vst [vmem:[#allocation15 + $0x2] sm:$0x3] %v367
    %376 = vst [vmem:[#allocation15 + $0x4] sm:$0x3] %v368
    %377 = vst [vmem:[#allocation15 + $0x6] sm:$0x3] %v369
    %378 = vst [vmem:[#allocation15 + $0x8] sm:$0x3] %v370
    %379 = vst [vmem:[#allocation15 + $0xa] sm:$0x3] %v371
    %380 = vst [vmem:[#allocation15 + $0xc] sm:$0x3] %v372
    %381 = vst [vmem:[#allocation15 + $0xe] sm:$0x3] %v373
    // Predicated region
    $region54: #{tpu_custom_call.1} parent=1 // pred_check
      _
    $region55: #{tpu_custom_call.1} parent=1 // pred_check_branch
      %383 = sbr.rel (0) target = $region57
    $region56: #{tpu_custom_call.1} parent=1 // pred_region
      %s385 = ssub.s32 256, 256
      %386 = vsyncadd [#allocation5], %s385
      %s387 = sshll.u32 [#allocation15], 4
      %s388 = int_to_ptr.vmem [resolvable:$true] %s387
      %393 = dma.vmem_to_hbm [thread:$0]  %s388, 256, %s7, [#allocation5], 32, 32, 2
    $region57: #{tpu_custom_call.1} parent=1 // pred_fallthru
      _
    // Predicated region
    $region58: #{tpu_custom_call.1} parent=1 // pred_check
      _
    $region59: #{tpu_custom_call.1} parent=1 // pred_check_branch
      %395 = sbr.rel (0) target = $region61
    $region60: #{tpu_custom_call.1} parent=1 // pred_region
      %396 = dma.done [#allocation5], 256
    $region61: #{tpu_custom_call.1} parent=1 // pred_fallthru
      _
    %397 = vsyncpa [#allocation4], 1
    %398 = vsyncpa [#allocation8], 1
    %399 = vsyncpa [#allocation5], 1
    %400 = vsyncpa [#allocation6], 1
    %401 = vsyncpa [#allocation11], 1
    %402 = vsyncpa [#allocation14], 1

</llo_original>
